<compile_context>
chip_gen: v6e
topology: v6e:2x2x1
jax: 0.10.0
libtpu: 0.0.40
codegen_flags: <defaults>
</compile_context>

<pallas_src>
import jax
import jax.numpy as jnp
from jax.experimental import pallas as pl
from jax.experimental.pallas import tpu as pltpu


def _round_up(x, m):
    return ((x + m - 1) // m) * m


def mlp_kernel(x_ref, w1_ref, b1_ref, w2_ref, b2_ref, o_ref):
    # fc1 in transposed layout: (Hp, F) contract (TB, F) on F -> (Hp, TB).
    # Batch maps to lanes; the MXU handles the implicit trans_b natively.
    h_t = jax.lax.dot_general(
        w1_ref[...],
        x_ref[...],
        dimension_numbers=(((1,), (1,)), ((), ())),
        preferred_element_type=jnp.float32,
    )
    # Bias (Hp, 1) broadcast over lanes + ReLU (VPU).
    h_t = jnp.maximum(h_t + b1_ref[...], 0.0)
    # fc2 off the MXU: elementwise multiply (VPU) + sublane reduce (XLU) -> (1, TB),
    # already lane-dense for the writeback store.
    z = jnp.sum(h_t * w2_ref[...], axis=0, keepdims=True)
    z = z + b2_ref[0, 0]  # scalar bias read from SMEM
    o_ref[...] = jax.nn.sigmoid(z).astype(o_ref.dtype)


def prepare_params(w1, b1, w2, b2):
    """One-time param prep (hoisted out of the forward path).

    PyTorch layout in:  w1 (H, F), b1 (H,), w2 (1, H), b2 (1,)
    Kernel layout out:  w1_p (Hp, F), b1_p (Hp, 1), w2_p (Hp, 1), b2_p (1, 1)
    with Hp = H rounded up to the sublane multiple (8); pads are exactly zero,
    so padded hidden units contribute nothing (relu(0)=0, w2_pad=0).
    """
    H, F = w1.shape
    Hp = _round_up(H, 8)
    w1_p = jnp.zeros((Hp, F), jnp.float32).at[:H, :].set(w1.astype(jnp.float32))
    b1_p = jnp.zeros((Hp, 1), jnp.float32).at[:H, 0].set(b1.astype(jnp.float32))
    w2_p = jnp.zeros((Hp, 1), jnp.float32).at[:H, 0].set(w2.reshape(-1).astype(jnp.float32))
    b2_p = b2.reshape(1, 1).astype(jnp.float32)
    return w1_p, b1_p, w2_p, b2_p


def neural_net_forward(x, params, *, tb=512):
    """x: (B, F) float32; params: output of prepare_params. Returns (B, 1) float32."""
    w1_p, b1_p, w2_p, b2_p = params
    x = x.astype(jnp.float32)
    B, F = x.shape
    Hp = w1_p.shape[0]

    # Batch tile: multiple of 128 (lane-dense output row), capped at `tb` rows.
    TB = min(_round_up(tb, 128), _round_up(B, 128))
    B_pad = _round_up(B, TB)
    if B_pad != B:
        x = jnp.pad(x, ((0, B_pad - B), (0, 0)))
    num_tiles = B_pad // TB

    out_row = pl.pallas_call(
        mlp_kernel,
        out_shape=jax.ShapeDtypeStruct((1, B_pad), jnp.float32),
        grid=(num_tiles,),
        in_specs=[
            pl.BlockSpec((TB, F), lambda i: (i, 0)),            # x: streamed per tile
            pl.BlockSpec((Hp, F), lambda i: (0, 0)),            # W1: VMEM-resident
            pl.BlockSpec((Hp, 1), lambda i: (0, 0)),            # b1: VMEM-resident
            pl.BlockSpec((Hp, 1), lambda i: (0, 0)),            # w2: VMEM-resident
            pl.BlockSpec(memory_space=pltpu.MemorySpace.SMEM),  # b2: scalar in SMEM
        ],
        out_specs=pl.BlockSpec((1, TB), lambda i: (0, i)),      # lane-dense output row
        compiler_params=pltpu.CompilerParams(
            dimension_semantics=("parallel",),   # megacore sharding on v7x; harmless elsewhere
            vmem_limit_bytes=32 * 1024 * 1024,   # safe default on v5e/v6e/v7x
        ),
    )(x, w1_p, b1_p, w2_p, b2_p)

    return out_row[0, :B].reshape(B, 1)


def init_params(key, input_size, hidden_size):
    """Deterministic init mimicking PyTorch nn.Linear default (U(-1/sqrt(fan_in), +))."""
    k1, k2, k3, k4 = jax.random.split(key, 4)
    bound1 = 1.0 / jnp.sqrt(jnp.float32(input_size))
    bound2 = 1.0 / jnp.sqrt(jnp.float32(hidden_size))
    w1 = jax.random.uniform(k1, (hidden_size, input_size), jnp.float32, -bound1, bound1)
    b1 = jax.random.uniform(k2, (hidden_size,), jnp.float32, -bound1, bound1)
    w2 = jax.random.uniform(k3, (1, hidden_size), jnp.float32, -bound2, bound2)
    b2 = jax.random.uniform(k4, (1,), jnp.float32, -bound2, bound2)
    return w1, b1, w2, b2


if __name__ == "__main__":
    key = jax.random.PRNGKey(0)
    k_x, k_p = jax.random.split(key)

    batch = 8
    input_size = 4      # Iris features
    hidden_size = 10

    x = jax.random.normal(k_x, (batch, input_size), jnp.float32)
    w1, b1, w2, b2 = init_params(k_p, input_size, hidden_size)

    # One-time parameter prep (padding / layout), hoisted out of the forward path.
    params = prepare_params(w1, b1, w2, b2)

    out = neural_net_forward(x, params)
    out = jax.block_until_ready(out)

    # Reference check in plain JAX (same math, PyTorch layout).
    ref = jax.nn.sigmoid(jnp.maximum(x @ w1.T + b1, 0.0) @ w2.T + b2)
    assert out.shape == (batch, 1)
    assert jnp.allclose(out, ref, atol=1e-5, rtol=1e-5)

    print("KERNEL_OK")
</pallas_src>

<mosaic_0001>
module attributes {stable_mosaic.version = 11 : i64} {
  func.func @mlp_kernel(%arg0: i32, %arg1: memref<128x4xf32, #tpu.memory_space<vmem>>, %arg2: memref<16x4xf32, #tpu.memory_space<vmem>>, %arg3: memref<16x1xf32, #tpu.memory_space<vmem>>, %arg4: memref<16x1xf32, #tpu.memory_space<vmem>>, %arg5: memref<1x1xf32, #tpu.memory_space<smem>>, %arg6: memref<1x128xf32, #tpu.memory_space<vmem>>) attributes {dimension_semantics = [#tpu.dimension_semantics<parallel>], iteration_bounds = array<i64: 1>, scalar_prefetch = 0 : i64, scratch_operands = 0 : i64, tpu.core_type = #tpu.core_type<tc>, window_params = [{transform_indices = @transform_0, window_bounds = array<i64: 128, 4>}, {pipeline_mode = #tpu.pipeline_mode<synchronous>, transform_indices = @transform_1, window_bounds = array<i64: 16, 4>}, {pipeline_mode = #tpu.pipeline_mode<synchronous>, transform_indices = @transform_2, window_bounds = array<i64: 16, 1>}, {pipeline_mode = #tpu.pipeline_mode<synchronous>, transform_indices = @transform_3, window_bounds = array<i64: 16, 1>}, {transform_indices = @transform_4, window_bounds = array<i64: 1, 1>}, {transform_indices = @transform_5, window_bounds = array<i64: 1, 128>}]} {
    %c0 = arith.constant 0 : index
    %c0_0 = arith.constant 0 : index
    %0 = vector.load %arg2[%c0, %c0_0] : memref<16x4xf32, #tpu.memory_space<vmem>>, vector<16x4xf32>
    %c0_1 = arith.constant 0 : index
    %c0_2 = arith.constant 0 : index
    %1 = vector.load %arg1[%c0_1, %c0_2] : memref<128x4xf32, #tpu.memory_space<vmem>>, vector<128x4xf32>
    %cst = arith.constant dense<0.000000e+00> : vector<16x128xf32>
    %2 = tpu.matmul %0, %1, %cst {dimension_numbers = #tpu.dot_dimension_numbers<[1], [1], [0], [0], [0, 0, 1, 0], [], []>} : vector<16x4xf32>, vector<128x4xf32>, vector<16x128xf32> -> vector<16x128xf32>
    %c0_3 = arith.constant 0 : index
    %c0_4 = arith.constant 0 : index
    %3 = vector.load %arg3[%c0_3, %c0_4] : memref<16x1xf32, #tpu.memory_space<vmem>>, vector<16x1xf32>
    %4 = vector.broadcast %3 : vector<16x1xf32> to vector<16x128xf32>
    %5 = arith.addf %2, %4 : vector<16x128xf32>
    %cst_5 = arith.constant 0.000000e+00 : f32
    %6 = vector.broadcast %cst_5 : f32 to vector<16x128xf32>
    %7 = arith.maximumf %5, %6 : vector<16x128xf32>
    %c0_6 = arith.constant 0 : index
    %c0_7 = arith.constant 0 : index
    %8 = vector.load %arg4[%c0_6, %c0_7] : memref<16x1xf32, #tpu.memory_space<vmem>>, vector<16x1xf32>
    %9 = vector.broadcast %8 : vector<16x1xf32> to vector<16x128xf32>
    %10 = arith.mulf %7, %9 : vector<16x128xf32>
    %cst_8 = arith.constant dense<0.000000e+00> : vector<128xf32>
    %11 = vector.multi_reduction <add>, %10, %cst_8 [0] : vector<16x128xf32> to vector<128xf32>
    %12 = vector.shape_cast %11 : vector<128xf32> to vector<1x128xf32>
    %c0_9 = arith.constant 0 : index
    %c0_10 = arith.constant 0 : index
    %13 = memref.load %arg5[%c0_9, %c0_10] : memref<1x1xf32, #tpu.memory_space<smem>>
    %14 = vector.broadcast %13 : f32 to vector<1x128xf32>
    %15 = arith.addf %12, %14 : vector<1x128xf32>
    %16 = arith.negf %15 : vector<1x128xf32>
    %17 = math.exp %16 : vector<1x128xf32>
    %cst_11 = arith.constant 1.000000e+00 : f32
    %18 = vector.broadcast %cst_11 : f32 to vector<1x128xf32>
    %19 = arith.addf %18, %17 : vector<1x128xf32>
    %20 = arith.divf %18, %19 : vector<1x128xf32>
    %c0_12 = arith.constant 0 : index
    %c0_13 = arith.constant 0 : index
    %21 = vector.load %arg6[%c0_12, %c0_13] : memref<1x128xf32, #tpu.memory_space<vmem>>, vector<1x128xf32>
    tpu.vector_store %arg6[%c0_12, %c0_13], %20 {strides = array<i32>} : memref<1x128xf32, #tpu.memory_space<vmem>>, vector<1x128xf32>,
    return
  }
  func.func @transform_0(%arg0: i32) -> (i32, i32) {
    %c0_i32 = arith.constant 0 : i32
    %c0_i32_0 = arith.constant 0 : i32
    return %arg0, %c0_i32 : i32, i32
  }
  func.func @transform_1(%arg0: i32) -> (i32, i32) {
    %c0_i32 = arith.constant 0 : i32
    %c0_i32_0 = arith.constant 0 : i32
    %c0_i32_1 = arith.constant 0 : i32
    return %c0_i32, %c0_i32_0 : i32, i32
  }
  func.func @transform_2(%arg0: i32) -> (i32, i32) {
    %c0_i32 = arith.constant 0 : i32
    %c0_i32_0 = arith.constant 0 : i32
    %c0_i32_1 = arith.constant 0 : i32
    return %c0_i32, %c0_i32_0 : i32, i32
  }
  func.func @transform_3(%arg0: i32) -> (i32, i32) {
    %c0_i32 = arith.constant 0 : i32
    %c0_i32_0 = arith.constant 0 : i32
    %c0_i32_1 = arith.constant 0 : i32
    return %c0_i32, %c0_i32_0 : i32, i32
  }
  func.func @transform_4(%arg0: i32) -> (i32, i32) {
    %c0_i32 = arith.constant 0 : i32
    %c0_i32_0 = arith.constant 0 : i32
    %c0_i32_1 = arith.constant 0 : i32
    return %c0_i32, %c0_i32_0 : i32, i32
  }
  func.func @transform_5(%arg0: i32) -> (i32, i32) {
    %c0_i32 = arith.constant 0 : i32
    %c0_i32_0 = arith.constant 0 : i32
    return %c0_i32, %arg0 : i32, i32
  }
}

</mosaic_0001>

<llo_original>
// kernel: tpu_custom_call.1
$region0: #{tpu_custom_call.1}
  #allocation0 [shape = 'u32[]', space=smem, size = 0x4, offset = 0x4, fixed_abs, tag = 'smem constant byte address 0x4 - core index']
  #allocation1 [shape = 'u32[144,128]{1,0:T(1,128)}', space=vmem, size = 0x12000, scoped, tag = 'internal scratch']
  #allocation2 [shape = 'f32[1,1]{1,0:T(1,128)S(6)}', space=smem, size = 0x200, scoped, tag = 'scoped memory for tpu_custom_call.1']
  %s0 = inlined_call_operand.vmem [shape: f32[128,4], index: 0, kind: input, shape index: {}]
  %s1 = inlined_call_operand.vmem [shape: f32[16,4], index: 1, kind: input, shape index: {}]
  %s2 = inlined_call_operand.vmem [shape: f32[16,1], index: 2, kind: input, shape index: {}]
  %s3 = inlined_call_operand.vmem [shape: f32[16,1], index: 3, kind: input, shape index: {}]
  %s4 = inlined_call_operand.<no memory space> [shape: f32[1,1], index: 4, kind: input, shape index: {}]
  %s5 = inlined_call_operand.hbm [shape: f32[1,128], index: 5, kind: output, shape index: {}]
  %s6 = sld [smem:[#allocation0]]
  $region30: #{tpu_custom_call.1} parent=0
    _
  %s8 = ssub.s32 1, %s6
  %s9 = scalar_select 0, %s8, %s6
  %10 = sst [smem:[#allocation2]] %s4
  $region1: #{tpu_custom_call.1} parent=0
    #allocation3 [shape = 'u8[512]{0}', space=vmem, size = 0x400, scoped, tag = 'output window, operand 0, single buffered']
    #allocation4 [shape = 's32[1]{0}', space=sflag, size = 0x4, scoped, tag = 'scoped memory for tpu_custom_call.1']
    %11 = vsyncpa [#allocation4], 0
    // Predicated region
    $region2: #{tpu_custom_call.1} parent=1 // pred_check
      _
    $region3: #{tpu_custom_call.1} parent=1 // pred_check_branch
      %13 = sbr.rel (0) target = $region5
    $region4: #{tpu_custom_call.1} parent=1 // pred_region
      _
    $region5: #{tpu_custom_call.1} parent=1 // pred_fallthru
      _
    // Predicated region
    $region6: #{tpu_custom_call.1} parent=1 // pred_check
      _
    $region7: #{tpu_custom_call.1} parent=1 // pred_check_branch
      %15 = sbr.rel (0) target = $region9
    $region8: #{tpu_custom_call.1} parent=1 // pred_region
      _
    $region9: #{tpu_custom_call.1} parent=1 // pred_fallthru
      _
    // Predicated region
    $region10: #{tpu_custom_call.1} parent=1 // pred_check
      _
    $region11: #{tpu_custom_call.1} parent=1 // pred_check_branch
      %17 = sbr.rel (0) target = $region13
    $region12: #{tpu_custom_call.1} parent=1 // pred_region
      _
    $region13: #{tpu_custom_call.1} parent=1 // pred_fallthru
      _
    // Predicated region
    $region14: #{tpu_custom_call.1} parent=1 // pred_check
      _
    $region15: #{tpu_custom_call.1} parent=1 // pred_check_branch
      %19 = sbr.rel (0) target = $region17
    $region16: #{tpu_custom_call.1} parent=1 // pred_region
      _
    $region17: #{tpu_custom_call.1} parent=1 // pred_fallthru
      _
    // Predicated region
    $region18: #{tpu_custom_call.1} parent=1 // pred_check
      _
    $region19: #{tpu_custom_call.1} parent=1 // pred_check_branch
      %21 = sbr.rel (0) target = $region21
    $region20: #{tpu_custom_call.1} parent=1 // pred_region
      _
    $region21: #{tpu_custom_call.1} parent=1 // pred_fallthru
      _
    %v22 = vld [vmem:[%s1] sm:$0xff]
    %v23 = vld [vmem:[%s1 + $0x8] sm:$0xff]
    %v24 = vld [vmem:[%s0] sm:$0xff]
    %v25 = vld [vmem:[%s0 + $0x8] sm:$0xff]
    %v26 = vld [vmem:[%s0 + $0x10] sm:$0xff]
    %v27 = vld [vmem:[%s0 + $0x18] sm:$0xff]
    %v28 = vld [vmem:[%s0 + $0x20] sm:$0xff]
    %v29 = vld [vmem:[%s0 + $0x28] sm:$0xff]
    %v30 = vld [vmem:[%s0 + $0x30] sm:$0xff]
    %v31 = vld [vmem:[%s0 + $0x38] sm:$0xff]
    %v32 = vld [vmem:[%s0 + $0x40] sm:$0xff]
    %v33 = vld [vmem:[%s0 + $0x48] sm:$0xff]
    %v34 = vld [vmem:[%s0 + $0x50] sm:$0xff]
    %v35 = vld [vmem:[%s0 + $0x58] sm:$0xff]
    %v36 = vld [vmem:[%s0 + $0x60] sm:$0xff]
    %v37 = vld [vmem:[%s0 + $0x68] sm:$0xff]
    %v38 = vld [vmem:[%s0 + $0x70] sm:$0xff]
    %v39 = vld [vmem:[%s0 + $0x78] sm:$0xff]
    %v40 = vld [vmem:[%s2] sm:$0xff]
    %v41 = vld [vmem:[%s2 + $0x8] sm:$0xff]
    %43 = vset.pattern.permute.xlu0 0
    %44 = vperm.xlu0 %43, %v40
    %v45 = vpop.permute.xlu0 %44
    %48 = vset.pattern.permute.xlu0 0
    %49 = vperm.xlu0 %48, %v41
    %v50 = vpop.permute.xlu0 %49
    %vm52 = vcmask 31744
    %v54 = vsel %vm52, %v22, 0
    %v57 = vsel %vm52, %v23, 0
    %v60 = vsel %vm52, %v24, 0
    %v63 = vsel %vm52, %v25, 0
    %v66 = vsel %vm52, %v26, 0
    %v69 = vsel %vm52, %v27, 0
    %v72 = vsel %vm52, %v28, 0
    %v75 = vsel %vm52, %v29, 0
    %v78 = vsel %vm52, %v30, 0
    %v81 = vsel %vm52, %v31, 0
    %v84 = vsel %vm52, %v32, 0
    %v87 = vsel %vm52, %v33, 0
    %v90 = vsel %vm52, %v34, 0
    %v93 = vsel %vm52, %v35, 0
    %v96 = vsel %vm52, %v36, 0
    %v99 = vsel %vm52, %v37, 0
    %v102 = vsel %vm52, %v38, 0
    %v105 = vsel %vm52, %v39, 0
    %107 = vmatprep.subr.mxu0 0.0
    %108 = vmatpush1.xpose.msra.mxu0 %v105
    %109 = vmatprep.subr.mxu0 0.0
    %110 = vmatpush1.xpose.msra.mxu0 %v102
    %111 = vmatprep.subr.mxu0 0.0
    %112 = vmatpush1.xpose.msra.mxu0 %v99
    %113 = vmatprep.subr.mxu0 0.0
    %114 = vmatpush1.xpose.msra.mxu0 %v96
    %115 = vmatprep.subr.mxu0 0.0
    %116 = vmatpush1.xpose.msra.mxu0 %v93
    %117 = vmatprep.subr.mxu0 0.0
    %118 = vmatpush1.xpose.msra.mxu0 %v90
    %119 = vmatprep.subr.mxu0 0.0
    %120 = vmatpush1.xpose.msra.mxu0 %v87
    %121 = vmatprep.subr.mxu0 0.0
    %122 = vmatpush1.xpose.msra.mxu0 %v84
    %123 = vmatprep.subr.mxu0 0.0
    %124 = vmatpush1.xpose.msra.mxu0 %v81
    %125 = vmatprep.subr.mxu0 0.0
    %126 = vmatpush1.xpose.msra.mxu0 %v78
    %127 = vmatprep.subr.mxu0 0.0
    %128 = vmatpush1.xpose.msra.mxu0 %v75
    %129 = vmatprep.subr.mxu0 0.0
    %130 = vmatpush1.xpose.msra.mxu0 %v72
    %131 = vmatprep.subr.mxu0 0.0
    %132 = vmatpush1.xpose.msra.mxu0 %v69
    %133 = vmatprep.subr.mxu0 0.0
    %134 = vmatpush1.xpose.msra.mxu0 %v66
    %135 = vmatprep.subr.mxu0 0.0
    %136 = vmatpush1.xpose.msra.mxu0 %v63
    %137 = vmatprep.subr.mxu0 0.0
    %138 = vmatpush1.xpose.msra.mxu0 %v60
    %139 = vmatprep.subr.mxu0 0.0
    %140 = vmatpush2.xpose.msra.mxu0 0.0
    %141 = vmatprep.subr.mxu0 0.0
    %142 = vmatpush2.xpose.msra.mxu0 0.0
    %143 = vmatprep.subr.mxu0 0.0
    %144 = vmatpush2.xpose.msra.mxu0 0.0
    %145 = vmatprep.subr.mxu0 0.0
    %146 = vmatpush2.xpose.msra.mxu0 0.0
    %147 = vmatprep.subr.mxu0 0.0
    %148 = vmatpush2.xpose.msra.mxu0 0.0
    %149 = vmatprep.subr.mxu0 0.0
    %150 = vmatpush2.xpose.msra.mxu0 0.0
    %151 = vmatprep.subr.mxu0 0.0
    %152 = vmatpush2.xpose.msra.mxu0 0.0
    %153 = vmatprep.subr.mxu0 0.0
    %154 = vmatpush2.xpose.msra.mxu0 0.0
    %155 = vmatprep.subr.mxu0 0.0
    %156 = vmatpush2.xpose.msra.mxu0 0.0
    %157 = vmatprep.subr.mxu0 0.0
    %158 = vmatpush2.xpose.msra.mxu0 0.0
    %159 = vmatprep.subr.mxu0 0.0
    %160 = vmatpush2.xpose.msra.mxu0 0.0
    %161 = vmatprep.subr.mxu0 0.0
    %162 = vmatpush2.xpose.msra.mxu0 0.0
    %163 = vmatprep.subr.mxu0 0.0
    %164 = vmatpush2.xpose.msra.mxu0 0.0
    %165 = vmatprep.subr.mxu0 0.0
    %166 = vmatpush2.xpose.msra.mxu0 0.0
    %167 = vmatprep.subr.mxu0 0.0
    %168 = vmatpush2.xpose.msra.mxu0 0.0
    %169 = vmatprep.subr.mxu0 0.0
    %170 = vmatpush2.xpose.msra.mxu0 0.0
    %171 = vmatprep.mubr.f32.mxu0 0.0
    %172 = vmatmul.mubr.f32.gmra.mxu0 %v54
    %v173 = vpop.f32.mrf.mxu0
    %v174 = vadd.f32 %v45, %v173
    %v175 = vpop.f32.mrf.mxu0
    %176 = vmatprep.mubr.f32.mxu0 0.0
    %177 = vmatmul.mubr.f32.gmra.mxu0 %v57
    %v178 = vpop.f32.mrf.mxu0
    %v179 = vadd.f32 %v50, %v178
    %v180 = vpop.f32.mrf.mxu0
    %181 = vdwg.mxu0
    %v182 = vmax.f32 %v174, 0.0
    %v183 = vmax.f32 %v179, 0.0
    %v184 = vld [vmem:[%s3] sm:$0xff]
    %v185 = vld [vmem:[%s3 + $0x8] sm:$0xff]
    %187 = vset.pattern.permute.xlu0 0
    %188 = vperm.xlu0 %187, %v184
    %v189 = vpop.permute.xlu0 %188
    %192 = vset.pattern.permute.xlu0 0
    %193 = vperm.xlu0 %192, %v185
    %v194 = vpop.permute.xlu0 %193
    %v196 = vmul.f32 %v182, %v189
    %v197 = vmul.f32 %v183, %v194
    %v198 = vadd.f32 %v196, %v197
    %v199 = vrot.slane %v198, 4
    %v200 = vadd.f32 %v198, %v199
    %v201 = vrot.slane %v200, 2
    %v202 = vadd.f32 %v200, %v201
    %v203 = vrot.slane %v202, 1
    %v204 = vadd.f32 %v202, %v203
    %s205 = sld [smem:[#allocation2]]
    %v206 = vstv %s205
    %v207 = vadd.f32 %v204, %v206
    %v208 = vxor.u32 %v207, 2147483648
    %v209 = vmul.f32 %v208, 1.442695
    %v210 = vpow.pop %v209
    %v211 = vadd.f32 %v210, 1.0
    %v212 = vrcp.pop %v211
    %v213 = vmul.f32 1.0, %v212
    %214 = vst [vmem:[#allocation3] sm:$0x1] %v213
    // Predicated region
    $region22: #{tpu_custom_call.1} parent=1 // pred_check
      _
    $region23: #{tpu_custom_call.1} parent=1 // pred_check_branch
      %216 = sbr.rel (0) target = $region25
    $region24: #{tpu_custom_call.1} parent=1 // pred_region
      %s218 = ssub.s32 16, 16
      %219 = vsyncadd [#allocation4], %s218
      %s221 = sshll.u32 [#allocation3], 4
      %s222 = int_to_ptr.vmem [resolvable:$true] %s221
      %224 = dma.vmem_to_hbm [thread:$0]  %s222, 16, %s5, [#allocation4]
    $region25: #{tpu_custom_call.1} parent=1 // pred_fallthru
      _
    // Predicated region
    $region26: #{tpu_custom_call.1} parent=1 // pred_check
      _
    $region27: #{tpu_custom_call.1} parent=1 // pred_check_branch
      %226 = sbr.rel (0) target = $region29
    $region28: #{tpu_custom_call.1} parent=1 // pred_region
      %227 = dma.done [#allocation4], 16
    $region29: #{tpu_custom_call.1} parent=1 // pred_fallthru
      _
    %228 = vsyncpa [#allocation4], 1

</llo_original>
